<compile_context>
chip_gen: v7x
topology: tpu7x:2x2x1
jax: 0.10.0
libtpu: 0.0.40
codegen_flags: <defaults>
</compile_context>

<pallas_src>
import functools

import jax
import jax.numpy as jnp
from jax.experimental import pallas as pl
from jax.experimental.pallas import tpu as pltpu

_LANE = 128
_SUBLANE = 8
_BLOCK_BUDGET_BYTES = 2 * 1024 * 1024  # per-input block; x2 inputs x2 buffers = ~8 MiB


def _round_up(x, m):
    return (x + m - 1) // m * m


def _dice_kernel(o_ref, l_ref, num_ref, den_ref, *, power):
    """Accumulate per-(n,c) numerator / denominator partial sums.

    grid = (row_tiles, hw_tiles). The outputs use the same block index for
    every hw step, so they are VMEM-resident accumulators along that axis.
    """
    @pl.when(pl.program_id(1) == 0)
    def _init():
        num_ref[...] = jnp.zeros_like(num_ref)
        den_ref[...] = jnp.zeros_like(den_ref)

    o = o_ref[...].astype(jnp.float32)   # (tr, thw)
    l = l_ref[...].astype(jnp.float32)   # (tr, thw)

    if power == 1:
        o_pow = o
    elif power == 2:
        o_pow = o * o
    else:
        o_pow = o ** power  # static Python int -> integer_pow (VPU multiplies)

    num_ref[...] += 2.0 * jnp.sum(o * l, axis=1, keepdims=True)        # (tr, 1)
    den_ref[...] += jnp.sum(o_pow + l, axis=1, keepdims=True)          # (tr, 1)


def _choose_tiles(nc, hw, elem_bytes):
    """Pick (tr, thw) so each input block is <= ~2 MiB, lane/sublane aligned."""
    # Spatial tile: multiple of 128 lanes, capped so even a minimal-row block
    # fits the budget (decouples VMEM use from image size).
    hw_128 = _round_up(hw, _LANE)
    thw_cap = max(_LANE,
                  (_BLOCK_BUDGET_BYTES // (_SUBLANE * elem_bytes)) // _LANE * _LANE)
    thw = min(hw_128, thw_cap)
    hw_pad = _round_up(hw, thw)

    # Row tile: fill the remaining budget. Multiple of 16 for sub-32-bit
    # inputs (bf16 sublane packing), otherwise 8.
    row_mult = 16 if elem_bytes < 4 else _SUBLANE
    tr_cap = max(row_mult,
                 (_BLOCK_BUDGET_BYTES // (thw * elem_bytes)) // row_mult * row_mult)
    tr = min(_round_up(nc, row_mult), tr_cap)
    nc_pad = _round_up(nc, tr)
    return tr, thw, nc_pad, hw_pad


def dice_loss(outputs, labels, power: int):
    """Pallas TPU implementation of DiceLoss(power).forward(outputs, labels).

    outputs, labels: (N, C, H, W) (f32 or bf16). Returns a scalar float32.
    """
    assert outputs.shape == labels.shape
    n, c, h, w = outputs.shape
    nc, hw = n * c, h * w

    o2 = outputs.reshape(nc, hw)
    l2 = labels.reshape(nc, hw)

    elem_bytes = jnp.dtype(outputs.dtype).itemsize
    tr, thw, nc_pad, hw_pad = _choose_tiles(nc, hw, elem_bytes)

    if hw_pad != hw:
        # Zero padding contributes 0 to all three spatial sums only if power >= 1.
        assert power >= 1, "spatial zero-padding requires power >= 1"
    if nc_pad != nc or hw_pad != hw:
        o2 = jnp.pad(o2, ((0, nc_pad - nc), (0, hw_pad - hw)))
        l2 = jnp.pad(l2, ((0, nc_pad - nc), (0, hw_pad - hw)))

    grid = (nc_pad // tr, hw_pad // thw)
    kernel = functools.partial(_dice_kernel, power=power)

    num, den = pl.pallas_call(
        kernel,
        out_shape=(
            jax.ShapeDtypeStruct((nc_pad, 1), jnp.float32),
            jax.ShapeDtypeStruct((nc_pad, 1), jnp.float32),
        ),
        grid_spec=pltpu.PrefetchScalarGridSpec(
            num_scalar_prefetch=0,
            grid=grid,
            in_specs=[
                pl.BlockSpec((tr, thw), lambda i, j: (i, j)),
                pl.BlockSpec((tr, thw), lambda i, j: (i, j)),
            ],
            out_specs=[
                pl.BlockSpec((tr, 1), lambda i, j: (i, 0)),
                pl.BlockSpec((tr, 1), lambda i, j: (i, 0)),
            ],
        ),
        compiler_params=pltpu.CompilerParams(
            # Row axis parallel (v7x megacore), HW reduction axis serial.
            dimension_semantics=("parallel", "arbitrary"),
            vmem_limit_bytes=48 * 1024 * 1024,
        ),
    )(o2, l2)

    # Tiny epilogue in plain JAX: per-(n,c) ratio over the valid rows, then
    # mean — matches the PyTorch reference ordering exactly (no smoothing term,
    # so an all-zero slice yields NaN just like the reference).
    ratio = num[:nc, 0] / den[:nc, 0]
    return (1.0 - 0.5 * jnp.mean(ratio)).astype(jnp.float32)


def dice_loss_ref(outputs, labels, power: int):
    """Pure-JAX reference, mirrors the PyTorch forward exactly."""
    numerator = 2 * (outputs * labels).sum(axis=(2, 3))
    denominator = (outputs ** power).sum(axis=(2, 3)) + labels.sum(axis=(2, 3))
    return 1 - 0.5 * (numerator / denominator).mean()


if __name__ == "__main__":
    POWER = 2  # DiceLoss(power=2)

    key = jax.random.PRNGKey(0)
    k1, k2, k3, k4 = jax.random.split(key, 4)

    # Small segmentation-style shapes: (N, C, H, W)
    outputs = jax.nn.sigmoid(jax.random.normal(k1, (2, 4, 16, 16), dtype=jnp.float32))
    labels = (jax.random.uniform(k2, (2, 4, 16, 16)) > 0.5).astype(jnp.float32)

    loss = jax.block_until_ready(dice_loss(outputs, labels, POWER))
    ref = jax.block_until_ready(dice_loss_ref(outputs, labels, POWER))
    assert jnp.allclose(loss, ref, rtol=1e-5, atol=1e-6), (loss, ref)

    # Also exercise the row / lane padding path (N*C and H*W not 8/128-aligned).
    outputs2 = jax.nn.sigmoid(jax.random.normal(k3, (2, 3, 20, 20), dtype=jnp.float32))
    labels2 = (jax.random.uniform(k4, (2, 3, 20, 20)) > 0.5).astype(jnp.float32)
    loss2 = jax.block_until_ready(dice_loss(outputs2, labels2, POWER))
    ref2 = jax.block_until_ready(dice_loss_ref(outputs2, labels2, POWER))
    assert jnp.allclose(loss2, ref2, rtol=1e-5, atol=1e-6), (loss2, ref2)

    print("KERNEL_OK")
</pallas_src>

<mosaic_0001>
module attributes {stable_mosaic.version = 11 : i64} {
  func.func @_dice_kernel(%arg0: i32, %arg1: i32, %arg2: memref<8x256xf32, #tpu.memory_space<vmem>>, %arg3: memref<8x256xf32, #tpu.memory_space<vmem>>, %arg4: memref<8x1xf32, #tpu.memory_space<vmem>>, %arg5: memref<8x1xf32, #tpu.memory_space<vmem>>) attributes {dimension_semantics = [#tpu.dimension_semantics<parallel>, #tpu.dimension_semantics<arbitrary>], iteration_bounds = array<i64: 1, 1>, scalar_prefetch = 0 : i64, scratch_operands = 0 : i64, tpu.core_type = #tpu.core_type<tc>, window_params = [{transform_indices = @transform_0, window_bounds = array<i64: 8, 256>}, {transform_indices = @transform_1, window_bounds = array<i64: 8, 256>}, {transform_indices = @transform_2, window_bounds = array<i64: 8, 1>}, {transform_indices = @transform_3, window_bounds = array<i64: 8, 1>}]} {
    %c0_i32 = arith.constant 0 : i32
    %0 = arith.cmpi eq, %arg1, %c0_i32 : i32
    %1 = arith.extui %0 : i1 to i32
    %c0_i32_0 = arith.constant 0 : i32
    %2 = arith.cmpi ne, %1, %c0_i32_0 : i32
    scf.if %2 {
      %cst_14 = arith.constant 0.000000e+00 : f32
      %20 = vector.broadcast %cst_14 : f32 to vector<8x1xf32>
      %c0_15 = arith.constant 0 : index
      %c0_16 = arith.constant 0 : index
      %21 = vector.load %arg4[%c0_15, %c0_16] : memref<8x1xf32, #tpu.memory_space<vmem>>, vector<8x1xf32>
      tpu.vector_store %arg4[%c0_15, %c0_16], %20 {strides = array<i32>} : memref<8x1xf32, #tpu.memory_space<vmem>>, vector<8x1xf32>,
      %cst_17 = arith.constant 0.000000e+00 : f32
      %22 = vector.broadcast %cst_17 : f32 to vector<8x1xf32>
      %c0_18 = arith.constant 0 : index
      %c0_19 = arith.constant 0 : index
      %23 = vector.load %arg5[%c0_18, %c0_19] : memref<8x1xf32, #tpu.memory_space<vmem>>, vector<8x1xf32>
      tpu.vector_store %arg5[%c0_18, %c0_19], %22 {strides = array<i32>} : memref<8x1xf32, #tpu.memory_space<vmem>>, vector<8x1xf32>,
    } else {
    }
    %c0 = arith.constant 0 : index
    %c0_1 = arith.constant 0 : index
    %3 = vector.load %arg2[%c0, %c0_1] : memref<8x256xf32, #tpu.memory_space<vmem>>, vector<8x256xf32>
    %c0_2 = arith.constant 0 : index
    %c0_3 = arith.constant 0 : index
    %4 = vector.load %arg3[%c0_2, %c0_3] : memref<8x256xf32, #tpu.memory_space<vmem>>, vector<8x256xf32>
    %5 = arith.mulf %3, %3 : vector<8x256xf32>
    %c0_4 = arith.constant 0 : index
    %c0_5 = arith.constant 0 : index
    %6 = vector.load %arg4[%c0_4, %c0_5] : memref<8x1xf32, #tpu.memory_space<vmem>>, vector<8x1xf32>
    %7 = arith.mulf %3, %4 : vector<8x256xf32>
    %cst = arith.constant dense<0.000000e+00> : vector<8xf32>
    %8 = vector.multi_reduction <add>, %7, %cst [1] : vector<8x256xf32> to vector<8xf32>
    %9 = vector.shape_cast %8 : vector<8xf32> to vector<8x1xf32>
    %cst_6 = arith.constant 2.000000e+00 : f32
    %10 = vector.broadcast %cst_6 : f32 to vector<8x1xf32>
    %11 = arith.mulf %10, %9 : vector<8x1xf32>
    %12 = arith.addf %6, %11 : vector<8x1xf32>
    %c0_7 = arith.constant 0 : index
    %c0_8 = arith.constant 0 : index
    %13 = vector.load %arg4[%c0_7, %c0_8] : memref<8x1xf32, #tpu.memory_space<vmem>>, vector<8x1xf32>
    tpu.vector_store %arg4[%c0_7, %c0_8], %12 {strides = array<i32>} : memref<8x1xf32, #tpu.memory_space<vmem>>, vector<8x1xf32>,
    %c0_9 = arith.constant 0 : index
    %c0_10 = arith.constant 0 : index
    %14 = vector.load %arg5[%c0_9, %c0_10] : memref<8x1xf32, #tpu.memory_space<vmem>>, vector<8x1xf32>
    %15 = arith.addf %5, %4 : vector<8x256xf32>
    %cst_11 = arith.constant dense<0.000000e+00> : vector<8xf32>
    %16 = vector.multi_reduction <add>, %15, %cst_11 [1] : vector<8x256xf32> to vector<8xf32>
    %17 = vector.shape_cast %16 : vector<8xf32> to vector<8x1xf32>
    %18 = arith.addf %14, %17 : vector<8x1xf32>
    %c0_12 = arith.constant 0 : index
    %c0_13 = arith.constant 0 : index
    %19 = vector.load %arg5[%c0_12, %c0_13] : memref<8x1xf32, #tpu.memory_space<vmem>>, vector<8x1xf32>
    tpu.vector_store %arg5[%c0_12, %c0_13], %18 {strides = array<i32>} : memref<8x1xf32, #tpu.memory_space<vmem>>, vector<8x1xf32>,
    return
  }
  func.func @transform_0(%arg0: i32, %arg1: i32) -> (i32, i32) {
    %c0_i32 = arith.constant 0 : i32
    return %arg0, %arg1 : i32, i32
  }
  func.func @transform_1(%arg0: i32, %arg1: i32) -> (i32, i32) {
    %c0_i32 = arith.constant 0 : i32
    return %arg0, %arg1 : i32, i32
  }
  func.func @transform_2(%arg0: i32, %arg1: i32) -> (i32, i32) {
    %c0_i32 = arith.constant 0 : i32
    %c0_i32_0 = arith.constant 0 : i32
    return %arg0, %c0_i32 : i32, i32
  }
  func.func @transform_3(%arg0: i32, %arg1: i32) -> (i32, i32) {
    %c0_i32 = arith.constant 0 : i32
    %c0_i32_0 = arith.constant 0 : i32
    return %arg0, %c0_i32 : i32, i32
  }
}

</mosaic_0001>

<llo_original>
// kernel: tpu_custom_call.1
$region0: #{tpu_custom_call.1}
  #allocation0 [shape = 'u32[]', space=smem, size = 0x4, offset = 0x4, fixed_abs, tag = 'smem constant byte address 0x4 - core index']
  #allocation1 [shape = 'u32[144,128]{1,0:T(1,128)}', space=vmem, size = 0x12000, scoped, tag = 'internal scratch']
  %s0 = inlined_call_operand.hbm [shape: f32[8,256], index: 0, kind: input, shape index: {}]
  %s1 = inlined_call_operand.hbm [shape: f32[8,256], index: 1, kind: input, shape index: {}]
  %s2 = inlined_call_operand.vmem [shape: f32[8,1], index: 2, kind: output, shape index: {0}]
  %s3 = inlined_call_operand.vmem [shape: f32[8,1], index: 3, kind: output, shape index: {1}]
  %4 = xla_tuple %s2, %s3
  %s5 = sld [smem:[#allocation0]]
  $region38: #{tpu_custom_call.1} parent=0
    _
  %s7 = ssub.s32 1, %s5
  %s8 = scalar_select 0, %s7, %s5
  $region1: #{tpu_custom_call.1} parent=0
    #allocation2 [shape = 'u8[8192]{0}', space=vmem, size = 0x2000, scoped, tag = 'input window, operand 0, single buffered']
    #allocation3 [shape = 's32[1]{0}', space=sflag, size = 0x4, scoped, tag = 'scoped memory for tpu_custom_call.1']
    #allocation4 [shape = 'u8[8192]{0}', space=vmem, size = 0x2000, scoped, tag = 'input window, operand 1, single buffered']
    #allocation5 [shape = 's32[1]{0}', space=sflag, size = 0x4, scoped, tag = 'scoped memory for tpu_custom_call.1']
    %9 = vsyncpa [#allocation3], 0
    %10 = vsyncpa [#allocation5], 0
    // Predicated region
    $region2: #{tpu_custom_call.1} parent=1 // pred_check
      _
    $region3: #{tpu_custom_call.1} parent=1 // pred_check_branch
      %12 = sbr.rel (0) target = $region5
    $region4: #{tpu_custom_call.1} parent=1 // pred_region
      %s14 = ssub.s32 256, 256
      %15 = vsyncadd [#allocation3], %s14
      %s17 = sshll.u32 [#allocation2], 4
      %s18 = int_to_ptr.vmem [resolvable:$true] %s17
      %20 = dma.hbm_to_vmem [thread:$0]  %s0, 256, %s18, [#allocation3]
    $region5: #{tpu_custom_call.1} parent=1 // pred_fallthru
      _
    // Predicated region
    $region6: #{tpu_custom_call.1} parent=1 // pred_check
      _
    $region7: #{tpu_custom_call.1} parent=1 // pred_check_branch
      %22 = sbr.rel (0) target = $region9
    $region8: #{tpu_custom_call.1} parent=1 // pred_region
      %s24 = ssub.s32 256, 256
      %25 = vsyncadd [#allocation5], %s24
      %s27 = sshll.u32 [#allocation4], 4
      %s28 = int_to_ptr.vmem [resolvable:$true] %s27
      %30 = dma.hbm_to_vmem [thread:$0]  %s1, 256, %s28, [#allocation5]
    $region9: #{tpu_custom_call.1} parent=1 // pred_fallthru
      _
    // Predicated region
    $region10: #{tpu_custom_call.1} parent=1 // pred_check
      _
    $region11: #{tpu_custom_call.1} parent=1 // pred_check_branch
      %32 = sbr.rel (0) target = $region13
    $region12: #{tpu_custom_call.1} parent=1 // pred_region
      %33 = dma.done [#allocation3], 256
    $region13: #{tpu_custom_call.1} parent=1 // pred_fallthru
      _
    // Predicated region
    $region14: #{tpu_custom_call.1} parent=1 // pred_check
      _
    $region15: #{tpu_custom_call.1} parent=1 // pred_check_branch
      %35 = sbr.rel (0) target = $region17
    $region16: #{tpu_custom_call.1} parent=1 // pred_region
      %36 = dma.done [#allocation5], 256
    $region17: #{tpu_custom_call.1} parent=1 // pred_fallthru
      _
    %p37 = scmp.eq.s32.totalorder 0, 0
    // Predicated region
    $region18: #{tpu_custom_call.1} parent=1 // pred_check
      %p38 = pneg %p37
    $region19: #{tpu_custom_call.1} parent=1 // pred_check_branch
      %40 = sbr.rel (%p38) target = $region21
    $region20: #{tpu_custom_call.1} parent=1 // pred_region
      %vm41 = vcmask 7168
      %42 = vst.msk [vmem:[%s2] sm:$0xff] %vm41, 0.0
      %43 = vst.msk [vmem:[%s3] sm:$0xff] %vm41, 0.0
    $region21: #{tpu_custom_call.1} parent=1 // pred_fallthru
      _
    %v44 = vld [vmem:[#allocation2] sm:$0xff]
    %v45 = vld [vmem:[#allocation2 + $0x8] sm:$0xff]
    %v46 = vld [vmem:[#allocation4] sm:$0xff]
    %v47 = vld [vmem:[#allocation4 + $0x8] sm:$0xff]
    %v48 = vmul.f32 %v44, %v44
    %v49 = vmul.f32 %v45, %v45
    %v50 = vld [vmem:[%s2] sm:$0xff]
    %v51 = vmul.f32 %v44, %v46
    %v52 = vmul.f32 %v45, %v47
    %v53 = vadd.f32 %v51, %v52
    %54 = vadd.xlane.f32.xlu0 %v53
    %v55 = vpop.xlane.xlu0 %54
    %v56 = vmul.f32 %v55, 2.0
    %v57 = vadd.f32 %v50, %v56
    %vm58 = vcmask 7168
    %59 = vst.msk [vmem:[%s2] sm:$0xff] %vm58, %v57
    %v60 = vld [vmem:[%s3] sm:$0xff]
    %v61 = vadd.f32 %v48, %v46
    %v62 = vadd.f32 %v49, %v47
    %v63 = vadd.f32 %v61, %v62
    %64 = vadd.xlane.f32.xlu0 %v63
    %v65 = vpop.xlane.xlu0 %64
    %v66 = vadd.f32 %v60, %v65
    %67 = vst.msk [vmem:[%s3] sm:$0xff] %vm58, %v66
    // Predicated region
    $region22: #{tpu_custom_call.1} parent=1 // pred_check
      _
    $region23: #{tpu_custom_call.1} parent=1 // pred_check_branch
      %69 = sbr.rel (0) target = $region25
    $region24: #{tpu_custom_call.1} parent=1 // pred_region
      _
    $region25: #{tpu_custom_call.1} parent=1 // pred_fallthru
      _
    // Predicated region
    $region26: #{tpu_custom_call.1} parent=1 // pred_check
      _
    $region27: #{tpu_custom_call.1} parent=1 // pred_check_branch
      %71 = sbr.rel (0) target = $region29
    $region28: #{tpu_custom_call.1} parent=1 // pred_region
      _
    $region29: #{tpu_custom_call.1} parent=1 // pred_fallthru
      _
    // Predicated region
    $region30: #{tpu_custom_call.1} parent=1 // pred_check
      _
    $region31: #{tpu_custom_call.1} parent=1 // pred_check_branch
      %73 = sbr.rel (0) target = $region33
    $region32: #{tpu_custom_call.1} parent=1 // pred_region
      _
    $region33: #{tpu_custom_call.1} parent=1 // pred_fallthru
      _
    // Predicated region
    $region34: #{tpu_custom_call.1} parent=1 // pred_check
      _
    $region35: #{tpu_custom_call.1} parent=1 // pred_check_branch
      %75 = sbr.rel (0) target = $region37
    $region36: #{tpu_custom_call.1} parent=1 // pred_region
      _
    $region37: #{tpu_custom_call.1} parent=1 // pred_fallthru
      _
    %76 = vsyncpa [#allocation3], 1
    %77 = vsyncpa [#allocation5], 1

</llo_original>
